<compile_context>
chip_gen: v6e
topology: v6e:2x2x1
jax: 0.10.0
libtpu: 0.0.40
codegen_flags: <defaults>
</compile_context>

<pallas_src>
import jax
import jax.numpy as jnp
from jax.experimental import pallas as pl
from jax.experimental.pallas import tpu as pltpu


_BN_EPS = 1e-5
_LEAKY_SLOPE = 0.1


def _fc_layer_kernel(x_ref, w_ref, b_ref, gamma_ref, beta_ref, o_ref, acc_ref):
    k = pl.program_id(1)

    # ---- init f32 accumulator on first K step ----
    @pl.when(k == 0)
    def _init():
        acc_ref[...] = jnp.zeros_like(acc_ref)

    # ---- Linear partial product: bf16 MXU matmul, f32 accumulate ----
    acc_ref[...] += jnp.dot(
        x_ref[...], w_ref[...], preferred_element_type=jnp.float32)

    # ---- epilogue on last K step: bias + LeakyReLU + BatchNorm (train mode) ----
    @pl.when(k == pl.num_programs(1) - 1)
    def _finalize():
        y = acc_ref[...] + b_ref[...]                 # (B, TN) + (1, TN)
        y = jnp.maximum(y, _LEAKY_SLOPE * y)          # LeakyReLU(0.1), one VPU op

        n = y.shape[0]
        inv_n = 1.0 / n
        mean = jnp.sum(y, axis=0, keepdims=True) * inv_n          # (1, TN)
        mean_sq = jnp.sum(y * y, axis=0, keepdims=True) * inv_n   # (1, TN)
        var = mean_sq - mean * mean                   # biased (train-mode) variance
        inv_std = jax.lax.rsqrt(var + _BN_EPS)

        # Fold BN into a single affine pass: out = y * scale + shift
        scale = gamma_ref[...] * inv_std
        shift = beta_ref[...] - mean * scale
        o_ref[...] = (y * scale + shift).astype(o_ref.dtype)


def _pick_tile(dim, candidates=(512, 384, 256, 128)):
    """Largest lane-aligned tile that divides `dim`, else the full extent."""
    for t in candidates:
        if dim % t == 0:
            return t
    return dim


def fc_layer_forward(x, w_t, b, gamma, beta, *, tn=None, tk=None):
    """x: (B, D_in), w_t: (D_in, D_out), b/gamma/beta: (1, D_out) -> (B, D_out) f32."""
    B, D_in = x.shape
    D_out = w_t.shape[1]

    tn = tn or _pick_tile(D_out)   # output-feature tile (multiple of 128 or full)
    tk = tk or _pick_tile(D_in)    # reduction tile       (multiple of 128 or full)
    grid = (D_out // tn, D_in // tk)

    # bf16 on the MXU path; accumulation and the BN epilogue stay in f32.
    x_bf = x.astype(jnp.bfloat16)
    w_bf = w_t.astype(jnp.bfloat16)

    cost = pl.CostEstimate(
        flops=2 * B * D_in * D_out,
        transcendentals=0,
        bytes_accessed=(x_bf.size * 2 + w_bf.size * 2
                        + B * D_out * 4 + 3 * D_out * 4),
    )

    return pl.pallas_call(
        _fc_layer_kernel,
        out_shape=jax.ShapeDtypeStruct((B, D_out), jnp.float32),
        grid_spec=pltpu.PrefetchScalarGridSpec(
            num_scalar_prefetch=0,
            grid=grid,
            in_specs=[
                pl.BlockSpec((B, tk), lambda j, k: (0, k)),    # x
                pl.BlockSpec((tk, tn), lambda j, k: (k, j)),   # w_t
                pl.BlockSpec((1, tn), lambda j, k: (0, j)),    # bias
                pl.BlockSpec((1, tn), lambda j, k: (0, j)),    # gamma
                pl.BlockSpec((1, tn), lambda j, k: (0, j)),    # beta
            ],
            out_specs=pl.BlockSpec((B, tn), lambda j, k: (0, j)),
            scratch_shapes=[pltpu.VMEM((B, tn), jnp.float32)],
        ),
        compiler_params=pltpu.CompilerParams(
            # D_out tiles are independent -> "parallel" (megacore on v7x);
            # K is the reduction carried in the accumulator -> "arbitrary".
            dimension_semantics=("parallel", "arbitrary"),
        ),
        cost_estimate=cost,
    )(x_bf, w_bf, b, gamma, beta)


def init_params(key, input_dim, output_dim):
    """Deterministic init mirroring nn.Linear default + BatchNorm1d defaults."""
    k_w, k_b = jax.random.split(key)
    bound = 1.0 / (input_dim ** 0.5)
    w = jax.random.uniform(k_w, (output_dim, input_dim), jnp.float32, -bound, bound)
    b = jax.random.uniform(k_b, (output_dim,), jnp.float32, -bound, bound)
    gamma = jnp.ones((output_dim,), jnp.float32)
    beta = jnp.zeros((output_dim,), jnp.float32)
    return w, b, gamma, beta


if __name__ == "__main__":
    B, D_IN, D_OUT = 8, 32, 128

    key = jax.random.PRNGKey(0)
    k_x, k_p = jax.random.split(key)

    x = jax.random.normal(k_x, (B, D_IN), jnp.float32)
    w, b, gamma, beta = init_params(k_p, D_IN, D_OUT)

    # Glue: pre-transpose weight, lift 1-D params to (1, D_out) rows.
    w_t = w.T                                  # (D_IN, D_OUT)
    b2 = b.reshape(1, D_OUT)
    gamma2 = gamma.reshape(1, D_OUT)
    beta2 = beta.reshape(1, D_OUT)

    out = fc_layer_forward(x, w_t, b2, gamma2, beta2)
    jax.block_until_ready(out)

    # Pure-JAX reference of the same math (bf16 MXU inputs, f32 accumulate).
    y_ref = jnp.dot(x.astype(jnp.bfloat16), w_t.astype(jnp.bfloat16),
                    preferred_element_type=jnp.float32) + b2
    y_ref = jnp.maximum(y_ref, _LEAKY_SLOPE * y_ref)
    m = y_ref.mean(axis=0, keepdims=True)
    v = ((y_ref - m) ** 2).mean(axis=0, keepdims=True)
    ref = gamma2 * (y_ref - m) / jnp.sqrt(v + _BN_EPS) + beta2

    assert jnp.allclose(out, ref, atol=2e-3, rtol=2e-3), "mismatch vs reference"

    print("KERNEL_OK")
</pallas_src>

<mosaic_0001>
module attributes {stable_mosaic.version = 11 : i64} {
  func.func @_fc_layer_kernel(%arg0: i32, %arg1: i32, %arg2: memref<8x32xbf16, #tpu.memory_space<vmem>>, %arg3: memref<32x128xbf16, #tpu.memory_space<vmem>>, %arg4: memref<1x128xf32, #tpu.memory_space<vmem>>, %arg5: memref<1x128xf32, #tpu.memory_space<vmem>>, %arg6: memref<1x128xf32, #tpu.memory_space<vmem>>, %arg7: memref<8x128xf32, #tpu.memory_space<vmem>>, %arg8: memref<8x128xf32, #tpu.memory_space<vmem>>) attributes {dimension_semantics = [#tpu.dimension_semantics<parallel>, #tpu.dimension_semantics<arbitrary>], iteration_bounds = array<i64: 1, 1>, scalar_prefetch = 0 : i64, scratch_operands = 1 : i64, tpu.core_type = #tpu.core_type<tc>, window_params = [{transform_indices = @transform_0, window_bounds = array<i64: 8, 32>}, {transform_indices = @transform_1, window_bounds = array<i64: 32, 128>}, {transform_indices = @transform_2, window_bounds = array<i64: 1, 128>}, {transform_indices = @transform_3, window_bounds = array<i64: 1, 128>}, {transform_indices = @transform_4, window_bounds = array<i64: 1, 128>}, {transform_indices = @transform_5, window_bounds = array<i64: 8, 128>}]} {
    %c0_i32 = arith.constant 0 : i32
    %0 = arith.cmpi eq, %arg1, %c0_i32 : i32
    %1 = arith.extui %0 : i1 to i32
    %c0_i32_0 = arith.constant 0 : i32
    %2 = arith.cmpi ne, %1, %c0_i32_0 : i32
    scf.if %2 {
      %cst_10 = arith.constant 0.000000e+00 : f32
      %12 = vector.broadcast %cst_10 : f32 to vector<8x128xf32>
      %c0_11 = arith.constant 0 : index
      %c0_12 = arith.constant 0 : index
      %13 = vector.load %arg8[%c0_11, %c0_12] : memref<8x128xf32, #tpu.memory_space<vmem>>, vector<8x128xf32>
      tpu.vector_store %arg8[%c0_11, %c0_12], %12 {strides = array<i32>} : memref<8x128xf32, #tpu.memory_space<vmem>>, vector<8x128xf32>,
    } else {
    }
    %c0 = arith.constant 0 : index
    %c0_1 = arith.constant 0 : index
    %3 = vector.load %arg8[%c0, %c0_1] : memref<8x128xf32, #tpu.memory_space<vmem>>, vector<8x128xf32>
    %c0_2 = arith.constant 0 : index
    %c0_3 = arith.constant 0 : index
    %4 = vector.load %arg2[%c0_2, %c0_3] : memref<8x32xbf16, #tpu.memory_space<vmem>>, vector<8x32xbf16>
    %c0_4 = arith.constant 0 : index
    %c0_5 = arith.constant 0 : index
    %5 = vector.load %arg3[%c0_4, %c0_5] : memref<32x128xbf16, #tpu.memory_space<vmem>>, vector<32x128xbf16>
    %cst = arith.constant dense<0.000000e+00> : vector<8x128xf32>
    %6 = tpu.matmul %4, %5, %cst {dimension_numbers = #tpu.dot_dimension_numbers<[1], [0], [0], [1], [0, 0, 1, 1], [], []>} : vector<8x32xbf16>, vector<32x128xbf16>, vector<8x128xf32> -> vector<8x128xf32>
    %7 = arith.addf %3, %6 : vector<8x128xf32>
    %c0_6 = arith.constant 0 : index
    %c0_7 = arith.constant 0 : index
    %8 = vector.load %arg8[%c0_6, %c0_7] : memref<8x128xf32, #tpu.memory_space<vmem>>, vector<8x128xf32>
    tpu.vector_store %arg8[%c0_6, %c0_7], %7 {strides = array<i32>} : memref<8x128xf32, #tpu.memory_space<vmem>>, vector<8x128xf32>,
    %c0_i32_8 = arith.constant 0 : i32
    %9 = arith.cmpi eq, %arg1, %c0_i32_8 : i32
    %10 = arith.extui %9 : i1 to i32
    %c0_i32_9 = arith.constant 0 : i32
    %11 = arith.cmpi ne, %10, %c0_i32_9 : i32
    scf.if %11 {
      %c0_10 = arith.constant 0 : index
      %c0_11 = arith.constant 0 : index
      %12 = vector.load %arg8[%c0_10, %c0_11] : memref<8x128xf32, #tpu.memory_space<vmem>>, vector<8x128xf32>
      %c0_12 = arith.constant 0 : index
      %c0_13 = arith.constant 0 : index
      %13 = vector.load %arg4[%c0_12, %c0_13] : memref<1x128xf32, #tpu.memory_space<vmem>>, vector<1x128xf32>
      %14 = vector.broadcast %13 : vector<1x128xf32> to vector<8x128xf32>
      %15 = arith.addf %12, %14 : vector<8x128xf32>
      %cst_14 = arith.constant 1.000000e-01 : f32
      %16 = vector.broadcast %cst_14 : f32 to vector<8x128xf32>
      %17 = arith.mulf %16, %15 : vector<8x128xf32>
      %18 = arith.maximumf %15, %17 : vector<8x128xf32>
      %cst_15 = arith.constant dense<0.000000e+00> : vector<128xf32>
      %19 = vector.multi_reduction <add>, %18, %cst_15 [0] : vector<8x128xf32> to vector<128xf32>
      %20 = vector.shape_cast %19 : vector<128xf32> to vector<1x128xf32>
      %cst_16 = arith.constant 1.250000e-01 : f32
      %21 = vector.broadcast %cst_16 : f32 to vector<1x128xf32>
      %22 = arith.mulf %20, %21 : vector<1x128xf32>
      %23 = arith.mulf %18, %18 : vector<8x128xf32>
      %cst_17 = arith.constant dense<0.000000e+00> : vector<128xf32>
      %24 = vector.multi_reduction <add>, %23, %cst_17 [0] : vector<8x128xf32> to vector<128xf32>
      %25 = vector.shape_cast %24 : vector<128xf32> to vector<1x128xf32>
      %cst_18 = arith.constant 1.250000e-01 : f32
      %26 = vector.broadcast %cst_18 : f32 to vector<1x128xf32>
      %27 = arith.mulf %25, %26 : vector<1x128xf32>
      %28 = arith.mulf %22, %22 : vector<1x128xf32>
      %29 = arith.subf %27, %28 : vector<1x128xf32>
      %cst_19 = arith.constant 9.99999974E-6 : f32
      %30 = vector.broadcast %cst_19 : f32 to vector<1x128xf32>
      %31 = arith.addf %29, %30 : vector<1x128xf32>
      %32 = math.rsqrt %31 : vector<1x128xf32>
      %c0_20 = arith.constant 0 : index
      %c0_21 = arith.constant 0 : index
      %33 = vector.load %arg5[%c0_20, %c0_21] : memref<1x128xf32, #tpu.memory_space<vmem>>, vector<1x128xf32>
      %34 = arith.mulf %33, %32 : vector<1x128xf32>
      %c0_22 = arith.constant 0 : index
      %c0_23 = arith.constant 0 : index
      %35 = vector.load %arg6[%c0_22, %c0_23] : memref<1x128xf32, #tpu.memory_space<vmem>>, vector<1x128xf32>
      %36 = arith.mulf %22, %34 : vector<1x128xf32>
      %37 = arith.subf %35, %36 : vector<1x128xf32>
      %38 = vector.broadcast %34 : vector<1x128xf32> to vector<8x128xf32>
      %39 = arith.mulf %18, %38 : vector<8x128xf32>
      %40 = vector.broadcast %37 : vector<1x128xf32> to vector<8x128xf32>
      %41 = arith.addf %39, %40 : vector<8x128xf32>
      %c0_24 = arith.constant 0 : index
      %c0_25 = arith.constant 0 : index
      %42 = vector.load %arg7[%c0_24, %c0_25] : memref<8x128xf32, #tpu.memory_space<vmem>>, vector<8x128xf32>
      tpu.vector_store %arg7[%c0_24, %c0_25], %41 {strides = array<i32>} : memref<8x128xf32, #tpu.memory_space<vmem>>, vector<8x128xf32>,
    } else {
    }
    return
  }
  func.func @transform_0(%arg0: i32, %arg1: i32) -> (i32, i32) {
    %c0_i32 = arith.constant 0 : i32
    %c0_i32_0 = arith.constant 0 : i32
    return %c0_i32, %arg1 : i32, i32
  }
  func.func @transform_1(%arg0: i32, %arg1: i32) -> (i32, i32) {
    %c0_i32 = arith.constant 0 : i32
    return %arg1, %arg0 : i32, i32
  }
  func.func @transform_2(%arg0: i32, %arg1: i32) -> (i32, i32) {
    %c0_i32 = arith.constant 0 : i32
    %c0_i32_0 = arith.constant 0 : i32
    return %c0_i32, %arg0 : i32, i32
  }
  func.func @transform_3(%arg0: i32, %arg1: i32) -> (i32, i32) {
    %c0_i32 = arith.constant 0 : i32
    %c0_i32_0 = arith.constant 0 : i32
    return %c0_i32, %arg0 : i32, i32
  }
  func.func @transform_4(%arg0: i32, %arg1: i32) -> (i32, i32) {
    %c0_i32 = arith.constant 0 : i32
    %c0_i32_0 = arith.constant 0 : i32
    return %c0_i32, %arg0 : i32, i32
  }
  func.func @transform_5(%arg0: i32, %arg1: i32) -> (i32, i32) {
    %c0_i32 = arith.constant 0 : i32
    %c0_i32_0 = arith.constant 0 : i32
    return %c0_i32, %arg0 : i32, i32
  }
}

</mosaic_0001>

<llo_original>
// kernel: tpu_custom_call.1
$region0: #{tpu_custom_call.1}
  #allocation0 [shape = 'u32[]', space=smem, size = 0x4, offset = 0x4, fixed_abs, tag = 'smem constant byte address 0x4 - core index']
  #allocation1 [shape = 'u32[144,128]{1,0:T(1,128)}', space=vmem, size = 0x12000, scoped, tag = 'internal scratch']
  #allocation2 [shape = 'f32[8,128]{1,0:T(8,128)}', space=vmem, size = 0x1000, scoped, tag = 'scratch operand']
  %s0 = inlined_call_operand.hbm [shape: bf16[8,32], index: 0, kind: input, shape index: {}]
  %s1 = inlined_call_operand.hbm [shape: bf16[32,128], index: 1, kind: input, shape index: {}]
  %s2 = inlined_call_operand.vmem [shape: f32[1,128], index: 2, kind: input, shape index: {}]
  %s3 = inlined_call_operand.vmem [shape: f32[1,128], index: 3, kind: input, shape index: {}]
  %s4 = inlined_call_operand.vmem [shape: f32[1,128], index: 4, kind: input, shape index: {}]
  %s5 = inlined_call_operand.hbm [shape: f32[8,128], index: 5, kind: output, shape index: {}]
  %s6 = sld [smem:[#allocation0]]
  $region46: #{tpu_custom_call.1} parent=0
    _
  %s8 = ssub.s32 1, %s6
  %s9 = scalar_select 0, %s8, %s6
  $region1: #{tpu_custom_call.1} parent=0
    #allocation3 [shape = 'u8[2048]{0}', space=vmem, size = 0x800, scoped, tag = 'input window, operand 0, single buffered']
    #allocation4 [shape = 's32[1]{0}', space=sflag, size = 0x4, scoped, tag = 'scoped memory for tpu_custom_call.1']
    #allocation5 [shape = 's32[1]{0}', space=sflag, size = 0x4, scoped, tag = 'scoped memory for tpu_custom_call.1']
    #allocation6 [shape = 'u8[8192]{0}', space=vmem, size = 0x2000, scoped, tag = 'input window, operand 1, single buffered']
    #allocation7 [shape = 's32[1]{0}', space=sflag, size = 0x4, scoped, tag = 'scoped memory for tpu_custom_call.1']
    #allocation8 [shape = 'u8[4096]{0}', space=vmem, size = 0x1000, scoped, tag = 'output window, operand 0, single buffered']
    %10 = vsyncpa [#allocation4], 0
    %11 = vsyncpa [#allocation7], 0
    %12 = vsyncpa [#allocation5], 0
    // Predicated region
    $region2: #{tpu_custom_call.1} parent=1 // pred_check
      _
    $region3: #{tpu_custom_call.1} parent=1 // pred_check_branch
      %14 = sbr.rel (0) target = $region5
    $region4: #{tpu_custom_call.1} parent=1 // pred_region
      %s16 = ssub.s32 64, 64
      %17 = vsyncadd [#allocation4], %s16
      %s19 = sshll.u32 [#allocation3], 4
      %s20 = int_to_ptr.vmem [resolvable:$true] %s19
      %22 = dma.hbm_to_vmem [thread:$0]  %s0, 64, %s20, [#allocation4]
    $region5: #{tpu_custom_call.1} parent=1 // pred_fallthru
      _
    // Predicated region
    $region6: #{tpu_custom_call.1} parent=1 // pred_check
      _
    $region7: #{tpu_custom_call.1} parent=1 // pred_check_branch
      %24 = sbr.rel (0) target = $region9
    $region8: #{tpu_custom_call.1} parent=1 // pred_region
      %s26 = ssub.s32 256, 256
      %27 = vsyncadd [#allocation7], %s26
      %s28 = sshll.u32 [#allocation6], 4
      %s29 = int_to_ptr.vmem [resolvable:$true] %s28
      %34 = dma.hbm_to_vmem [thread:$0]  %s1, 256, %s29, [#allocation7], 64, 64, 4
    $region9: #{tpu_custom_call.1} parent=1 // pred_fallthru
      _
    // Predicated region
    $region10: #{tpu_custom_call.1} parent=1 // pred_check
      _
    $region11: #{tpu_custom_call.1} parent=1 // pred_check_branch
      %36 = sbr.rel (0) target = $region13
    $region12: #{tpu_custom_call.1} parent=1 // pred_region
      _
    $region13: #{tpu_custom_call.1} parent=1 // pred_fallthru
      _
    // Predicated region
    $region14: #{tpu_custom_call.1} parent=1 // pred_check
      _
    $region15: #{tpu_custom_call.1} parent=1 // pred_check_branch
      %38 = sbr.rel (0) target = $region17
    $region16: #{tpu_custom_call.1} parent=1 // pred_region
      _
    $region17: #{tpu_custom_call.1} parent=1 // pred_fallthru
      _
    // Predicated region
    $region18: #{tpu_custom_call.1} parent=1 // pred_check
      _
    $region19: #{tpu_custom_call.1} parent=1 // pred_check_branch
      %40 = sbr.rel (0) target = $region21
    $region20: #{tpu_custom_call.1} parent=1 // pred_region
      _
    $region21: #{tpu_custom_call.1} parent=1 // pred_fallthru
      _
    // Predicated region
    $region22: #{tpu_custom_call.1} parent=1 // pred_check
      _
    $region23: #{tpu_custom_call.1} parent=1 // pred_check_branch
      %42 = sbr.rel (0) target = $region25
    $region24: #{tpu_custom_call.1} parent=1 // pred_region
      %43 = dma.done [#allocation4], 64
    $region25: #{tpu_custom_call.1} parent=1 // pred_fallthru
      _
    // Predicated region
    $region26: #{tpu_custom_call.1} parent=1 // pred_check
      _
    $region27: #{tpu_custom_call.1} parent=1 // pred_check_branch
      %45 = sbr.rel (0) target = $region29
    $region28: #{tpu_custom_call.1} parent=1 // pred_region
      %46 = dma.done [#allocation7], 256
    $region29: #{tpu_custom_call.1} parent=1 // pred_fallthru
      _
    %p48 = scmp.eq.s32.totalorder 0, 0
    // Predicated region
    $region30: #{tpu_custom_call.1} parent=1 // pred_check
      %p49 = pneg %p48
    $region31: #{tpu_custom_call.1} parent=1 // pred_check_branch
      %51 = sbr.rel (%p49) target = $region33
    $region32: #{tpu_custom_call.1} parent=1 // pred_region
      %52 = vst [vmem:[#allocation2] sm:$0xff] 0.0
    $region33: #{tpu_custom_call.1} parent=1 // pred_fallthru
      _
    %v53 = vld [vmem:[#allocation2] sm:$0xff]
    %v54 = vld [vmem:[#allocation3] sm:$0xf]
    %v55 = vld [vmem:[#allocation6] sm:$0xf]
    %v56 = vld [vmem:[#allocation6 + $0x4] sm:$0xf]
    %v57 = vld [vmem:[#allocation6 + $0x8] sm:$0xf]
    %v58 = vld [vmem:[#allocation6 + $0xc] sm:$0xf]
    %v63 = vunpack.c.l.b16 %v55
    %v64 = vunpack.c.l.b16 %v56
    %v65 = vunpack.c.l.b16 %v57
    %v66 = vunpack.c.l.b16 %v58
    %v67 = vpack.c.b16 %v64, %v63
    %v68 = vpack.c.b16 %v66, %v65
    %vm71 = vcmask 261120
    %v73 = vsel %vm71, %v54, 0
    %75 = vmatprep.subr.bf16.mxu0 0
    %76 = vmatpush1.bf16.msra.mxu0 0
    %77 = vmatprep.subr.bf16.mxu0 0
    %78 = vmatpush1.bf16.msra.mxu0 0
    %79 = vmatprep.subr.bf16.mxu0 0
    %80 = vmatpush1.bf16.msra.mxu0 0
    %81 = vmatprep.subr.bf16.mxu0 0
    %82 = vmatpush1.bf16.msra.mxu0 0
    %83 = vmatprep.subr.bf16.mxu0 0
    %84 = vmatpush1.bf16.msra.mxu0 0
    %85 = vmatprep.subr.bf16.mxu0 0
    %86 = vmatpush1.bf16.msra.mxu0 0
    %87 = vmatprep.subr.bf16.mxu0 0
    %88 = vmatpush1.bf16.msra.mxu0 %v68
    %89 = vmatprep.subr.bf16.mxu0 0
    %90 = vmatpush1.bf16.msra.mxu0 %v67
    %91 = vmatprep.subr.bf16.mxu0 0
    %92 = vmatpush2.bf16.msra.mxu0 0
    %93 = vmatprep.subr.bf16.mxu0 0
    %94 = vmatpush2.bf16.msra.mxu0 0
    %95 = vmatprep.subr.bf16.mxu0 0
    %96 = vmatpush2.bf16.msra.mxu0 0
    %97 = vmatprep.subr.bf16.mxu0 0
    %98 = vmatpush2.bf16.msra.mxu0 0
    %99 = vmatprep.subr.bf16.mxu0 0
    %100 = vmatpush2.bf16.msra.mxu0 0
    %101 = vmatprep.subr.bf16.mxu0 0
    %102 = vmatpush2.bf16.msra.mxu0 0
    %103 = vmatprep.subr.bf16.mxu0 0
    %104 = vmatpush2.bf16.msra.mxu0 0
    %105 = vmatprep.subr.bf16.mxu0 0
    %106 = vmatpush2.bf16.msra.mxu0 0
    %107 = vmatprep.mubr.bf16.mxu0 0
    %108 = vmatmul.mubr.bf16.gmra.mxu0 %v73
    %v109 = vpop.f32.mrf.mxu0
    %v110 = vadd.f32 0.0, %v109
    %v111 = vpop.f32.mrf.mxu0
    %v112 = vpop.f32.mrf.mxu0
    %v113 = vpop.f32.mrf.mxu0
    %114 = vdwg.mxu0
    %v115 = vadd.f32 %v53, %v110
    %116 = vst [vmem:[#allocation2] sm:$0xff] %v115
    // Predicated region
    $region34: #{tpu_custom_call.1} parent=1 // pred_check
      %p117 = pneg %p48
    $region35: #{tpu_custom_call.1} parent=1 // pred_check_branch
      %119 = sbr.rel (%p117) target = $region37
    $region36: #{tpu_custom_call.1} parent=1 // pred_region
      %v120 = vld [vmem:[#allocation2] sm:$0xff]
      %v121 = vld [vmem:[%s2] sm:$0x1]
      %v123 = vlaneseq
      %v124 = vshrl.u32 %v123, 7
      %v125 = vsub.s32 0, %v124
      %v126 = vrot.slane %v121, %v125
      %v128 = vadd.f32 %v120, %v126
      %v129 = vmul.f32 %v128, 0.1
      %v130 = vmax.f32 %v128, %v129
      %v131 = vrot.slane %v130, 4
      %v132 = vadd.f32 %v130, %v131
      %v133 = vrot.slane %v132, 2
      %v134 = vadd.f32 %v132, %v133
      %v135 = vrot.slane %v134, 1
      %v136 = vadd.f32 %v134, %v135
      %v137 = vmul.f32 %v136, 0.125
      %v138 = vmul.f32 %v130, %v130
      %v139 = vrot.slane %v138, 4
      %v140 = vadd.f32 %v138, %v139
      %v141 = vrot.slane %v140, 2
      %v142 = vadd.f32 %v140, %v141
      %v143 = vrot.slane %v142, 1
      %v144 = vadd.f32 %v142, %v143
      %v145 = vmul.f32 %v144, 0.125
      %v146 = vmul.f32 %v137, %v137
      %v147 = vsub.f32 %v145, %v146
      %v148 = vadd.f32 %v147, 1e-05
      %v149 = vrsqrt.pop %v148
      %v150 = vld [vmem:[%s3] sm:$0x1]
      %v151 = vmul.f32 %v150, %v149
      %v152 = vld [vmem:[%s4] sm:$0x1]
      %v153 = vmul.f32 %v137, %v151
      %v154 = vsub.f32 %v152, %v153
      %v156 = vlaneseq
      %v157 = vshrl.u32 %v156, 7
      %v158 = vsub.s32 0, %v157
      %v159 = vrot.slane %v151, %v158
      %v161 = vmul.f32 %v130, %v159
      %v163 = vlaneseq
      %v164 = vshrl.u32 %v163, 7
      %v165 = vsub.s32 0, %v164
      %v166 = vrot.slane %v154, %v165
      %v168 = vadd.f32 %v161, %v166
      %169 = vst [vmem:[#allocation8] sm:$0xff] %v168
    $region37: #{tpu_custom_call.1} parent=1 // pred_fallthru
      _
    // Predicated region
    $region38: #{tpu_custom_call.1} parent=1 // pred_check
      _
    $region39: #{tpu_custom_call.1} parent=1 // pred_check_branch
      %171 = sbr.rel (0) target = $region41
    $region40: #{tpu_custom_call.1} parent=1 // pred_region
      %s173 = ssub.s32 128, 128
      %174 = vsyncadd [#allocation5], %s173
      %s176 = sshll.u32 [#allocation8], 4
      %s177 = int_to_ptr.vmem [resolvable:$true] %s176
      %179 = dma.vmem_to_hbm [thread:$0]  %s177, 128, %s5, [#allocation5]
    $region41: #{tpu_custom_call.1} parent=1 // pred_fallthru
      _
    // Predicated region
    $region42: #{tpu_custom_call.1} parent=1 // pred_check
      _
    $region43: #{tpu_custom_call.1} parent=1 // pred_check_branch
      %181 = sbr.rel (0) target = $region45
    $region44: #{tpu_custom_call.1} parent=1 // pred_region
      %182 = dma.done [#allocation5], 128
    $region45: #{tpu_custom_call.1} parent=1 // pred_fallthru
      _
    %183 = vsyncpa [#allocation4], 1
    %184 = vsyncpa [#allocation7], 1
    %185 = vsyncpa [#allocation5], 1

</llo_original>
